<compile_context>
chip_gen: v5e
topology: v5e:2x2
jax: 0.10.0
libtpu: 0.0.40
codegen_flags: <defaults>
</compile_context>

<pallas_src>
import functools

import jax
import jax.numpy as jnp
import numpy as np
from jax import lax
from jax.experimental import pallas as pl
from jax.experimental.pallas import tpu as pltpu


def _conv_bn_leaky_kernel(x_ref, w_ref, bias_ref, o_ref):
    # x_ref   : (TM, Kp)  bf16  im2col activation tile
    # w_ref   : (Kp, Np)  bf16  conv weights with BN scale folded in (resident)
    # bias_ref: (1,  Np)  f32   fused bias  (beta + (b_conv - mean) * scale)
    # o_ref   : (TM, Np)  f32   output tile
    acc = jnp.dot(x_ref[...], w_ref[...], preferred_element_type=jnp.float32)
    y = acc + bias_ref[...]
    o_ref[...] = jnp.where(y > 0, y, 0.1 * y)          # LeakyReLU(0.1)


def _round_up(x, m):
    return (x + m - 1) // m * m


@functools.partial(jax.jit,
                   static_argnames=("stride", "pad", "eps", "block_rows"))
def conv_bn_leaky(x_nchw, w_hwio, b, gamma, beta, run_mean, run_var,
                  *, stride=1, pad=1, eps=1e-5, block_rows=256):
    """PyTorch-equivalent Conv_BN_Leaky forward (eval-mode BN).

    x_nchw : (B, Cin, H, W) float32
    w_hwio : (kh, kw, Cin, Cout) conv weight,  b: (Cout,) conv bias
    gamma/beta/run_mean/run_var : (Cout,) BatchNorm2d parameters / stats
    Returns (B, Cout, Hout, Wout) float32.
    """
    B, Cin, H, W = x_nchw.shape
    kh, kw, _, Cout = w_hwio.shape
    Hout = (H + 2 * pad - kh) // stride + 1
    Wout = (W + 2 * pad - kw) // stride + 1

    # Fold conv bias + BN (running stats) into the weights / a per-channel bias.
    scale = gamma / jnp.sqrt(run_var + eps)                       # (Cout,)
    bias = beta + (b - run_mean) * scale                          # (Cout,)
    w_folded = w_hwio * scale                                     # (kh,kw,Cin,Cout)

    # ---- im2col in the wrapper: (B*Hout*Wout, kh*kw*Cin), tap-major layout
    # matching reshape of the HWIO weight to (kh*kw*Cin, Cout).
    x_nhwc = jnp.transpose(x_nchw, (0, 2, 3, 1))                  # (B,H,W,Cin)
    x_padded = jnp.pad(x_nhwc, ((0, 0), (pad, pad), (pad, pad), (0, 0)))
    taps = []
    for ky in range(kh):
        for kx in range(kw):
            taps.append(lax.slice(
                x_padded,
                (0, ky, kx, 0),
                (B, ky + stride * (Hout - 1) + 1,
                 kx + stride * (Wout - 1) + 1, Cin),
                (1, stride, stride, 1)))
    K = kh * kw * Cin
    rows = B * Hout * Wout
    x_cols = jnp.concatenate(taps, axis=-1).reshape(rows, K)

    # ---- pad to lane/sublane-friendly shapes.
    Kp = _round_up(K, 128)                     # lane-aligned contraction dim
    Np = _round_up(Cout, 128)                  # lane-dense output stores
    TM = min(block_rows, _round_up(rows, 8))   # row tile (multiple of 8)
    rows_p = _round_up(rows, TM)

    x_cols = jnp.pad(x_cols, ((0, rows_p - rows), (0, Kp - K)))
    x_cols = x_cols.astype(jnp.bfloat16)                          # bf16 MXU path
    w2d = jnp.pad(w_folded.reshape(K, Cout),
                  ((0, Kp - K), (0, Np - Cout))).astype(jnp.bfloat16)
    bias_p = jnp.pad(bias, (0, Np - Cout)).reshape(1, Np).astype(jnp.float32)

    grid = (rows_p // TM,)
    cost = pl.CostEstimate(
        flops=2 * rows_p * Kp * Np,
        transcendentals=0,
        bytes_accessed=(x_cols.size * 2 + w2d.size * 2
                        + bias_p.size * 4
                        + rows_p * Np * 4))

    out2d = pl.pallas_call(
        _conv_bn_leaky_kernel,
        out_shape=jax.ShapeDtypeStruct((rows_p, Np), jnp.float32),
        grid=grid,
        in_specs=[
            pl.BlockSpec((TM, Kp), lambda i: (i, 0)),   # activation tile
            pl.BlockSpec((Kp, Np), lambda i: (0, 0)),   # folded weights (resident)
            pl.BlockSpec((1, Np), lambda i: (0, 0)),    # fused bias (resident)
        ],
        out_specs=pl.BlockSpec((TM, Np), lambda i: (i, 0)),
        compiler_params=pltpu.CompilerParams(
            dimension_semantics=("parallel",)),
        cost_estimate=cost,
    )(x_cols, w2d, bias_p)

    out = out2d[:rows, :Cout].reshape(B, Hout, Wout, Cout)
    return jnp.transpose(out, (0, 3, 1, 2))                       # NCHW


def _reference(x_nchw, w_hwio, b, gamma, beta, run_mean, run_var,
               *, stride=1, pad=1, eps=1e-5):
    """Pure-JAX f32 reference (same math as PyTorch Conv_BN_Leaky in eval)."""
    x = jnp.transpose(x_nchw, (0, 2, 3, 1))                       # NHWC
    y = lax.conv_general_dilated(
        x, w_hwio, window_strides=(stride, stride),
        padding=((pad, pad), (pad, pad)),
        dimension_numbers=("NHWC", "HWIO", "NHWC"),
        precision=jax.lax.Precision.HIGHEST) + b
    y = (y - run_mean) / jnp.sqrt(run_var + eps) * gamma + beta
    y = jnp.where(y > 0, y, 0.1 * y)
    return jnp.transpose(y, (0, 3, 1, 2))


if __name__ == "__main__":
    key = jax.random.PRNGKey(0)
    B, Cin, H, W = 2, 4, 16, 16
    Cout = 8                         # out_num
    k_size, stride, pad = 3, 1, 1

    ks = jax.random.split(key, 7)
    x = jax.random.normal(ks[0], (B, Cin, H, W), jnp.float32)

    # Deterministic synthetic parameters (same shapes as the PyTorch module).
    w1 = jax.random.normal(ks[1], (k_size, k_size, Cin, Cout), jnp.float32) * 0.1
    b1 = jax.random.normal(ks[2], (Cout,), jnp.float32) * 0.1
    gamma = 1.0 + 0.1 * jax.random.normal(ks[3], (Cout,), jnp.float32)
    beta = 0.1 * jax.random.normal(ks[4], (Cout,), jnp.float32)
    run_mean = 0.1 * jax.random.normal(ks[5], (Cout,), jnp.float32)
    run_var = 1.0 + 0.1 * jnp.abs(jax.random.normal(ks[6], (Cout,), jnp.float32))

    out = conv_bn_leaky(x, w1, b1, gamma, beta, run_mean, run_var,
                        stride=stride, pad=pad)
    out = jax.block_until_ready(out)
    assert out.shape == (B, Cout, H, W), out.shape

    ref = _reference(x, w1, b1, gamma, beta, run_mean, run_var,
                     stride=stride, pad=pad)
    ref = jax.block_until_ready(ref)
    # bf16 MXU inputs with f32 accumulation -> relaxed tolerance vs f32 ref.
    np.testing.assert_allclose(np.asarray(out), np.asarray(ref),
                               rtol=2e-2, atol=2e-2)
    print("KERNEL_OK")
</pallas_src>

<mosaic_0001>
module attributes {stable_mosaic.version = 11 : i64} {
  func.func @_conv_bn_leaky_kernel(%arg0: i32, %arg1: memref<256x128xbf16, #tpu.memory_space<vmem>>, %arg2: memref<128x128xbf16, #tpu.memory_space<vmem>>, %arg3: memref<1x128xf32, #tpu.memory_space<vmem>>, %arg4: memref<256x128xf32, #tpu.memory_space<vmem>>) attributes {dimension_semantics = [#tpu.dimension_semantics<parallel>], iteration_bounds = array<i64: 2>, scalar_prefetch = 0 : i64, scratch_operands = 0 : i64, tpu.core_type = #tpu.core_type<tc>, window_params = [{transform_indices = @transform_0, window_bounds = array<i64: 256, 128>}, {pipeline_mode = #tpu.pipeline_mode<synchronous>, transform_indices = @transform_1, window_bounds = array<i64: 128, 128>}, {pipeline_mode = #tpu.pipeline_mode<synchronous>, transform_indices = @transform_2, window_bounds = array<i64: 1, 128>}, {transform_indices = @transform_3, window_bounds = array<i64: 256, 128>}]} {
    %c0 = arith.constant 0 : index
    %c0_0 = arith.constant 0 : index
    %0 = vector.load %arg1[%c0, %c0_0] : memref<256x128xbf16, #tpu.memory_space<vmem>>, vector<256x128xbf16>
    %c0_1 = arith.constant 0 : index
    %c0_2 = arith.constant 0 : index
    %1 = vector.load %arg2[%c0_1, %c0_2] : memref<128x128xbf16, #tpu.memory_space<vmem>>, vector<128x128xbf16>
    %cst = arith.constant dense<0.000000e+00> : vector<256x128xf32>
    %2 = tpu.matmul %0, %1, %cst {dimension_numbers = #tpu.dot_dimension_numbers<[1], [0], [0], [1], [0, 0, 1, 1], [], []>} : vector<256x128xbf16>, vector<128x128xbf16>, vector<256x128xf32> -> vector<256x128xf32>
    %c0_3 = arith.constant 0 : index
    %c0_4 = arith.constant 0 : index
    %3 = vector.load %arg3[%c0_3, %c0_4] : memref<1x128xf32, #tpu.memory_space<vmem>>, vector<1x128xf32>
    %4 = vector.broadcast %3 : vector<1x128xf32> to vector<256x128xf32>
    %5 = arith.addf %2, %4 : vector<256x128xf32>
    %cst_5 = arith.constant 0.000000e+00 : f32
    %6 = vector.broadcast %cst_5 : f32 to vector<256x128xf32>
    %7 = arith.cmpf ogt, %5, %6 : vector<256x128xf32>
    %cst_6 = arith.constant 1.000000e-01 : f32
    %8 = vector.broadcast %cst_6 : f32 to vector<256x128xf32>
    %9 = arith.mulf %8, %5 : vector<256x128xf32>
    %10 = arith.select %7, %5, %9 : vector<256x128xi1>, vector<256x128xf32>
    %c0_7 = arith.constant 0 : index
    %c0_8 = arith.constant 0 : index
    %11 = vector.load %arg4[%c0_7, %c0_8] : memref<256x128xf32, #tpu.memory_space<vmem>>, vector<256x128xf32>
    tpu.vector_store %arg4[%c0_7, %c0_8], %10 {strides = array<i32>} : memref<256x128xf32, #tpu.memory_space<vmem>>, vector<256x128xf32>,
    return
  }
  func.func @transform_0(%arg0: i32) -> (i32, i32) {
    %c0_i32 = arith.constant 0 : i32
    %c0_i32_0 = arith.constant 0 : i32
    return %arg0, %c0_i32 : i32, i32
  }
  func.func @transform_1(%arg0: i32) -> (i32, i32) {
    %c0_i32 = arith.constant 0 : i32
    %c0_i32_0 = arith.constant 0 : i32
    %c0_i32_1 = arith.constant 0 : i32
    return %c0_i32, %c0_i32_0 : i32, i32
  }
  func.func @transform_2(%arg0: i32) -> (i32, i32) {
    %c0_i32 = arith.constant 0 : i32
    %c0_i32_0 = arith.constant 0 : i32
    %c0_i32_1 = arith.constant 0 : i32
    return %c0_i32, %c0_i32_0 : i32, i32
  }
  func.func @transform_3(%arg0: i32) -> (i32, i32) {
    %c0_i32 = arith.constant 0 : i32
    %c0_i32_0 = arith.constant 0 : i32
    return %arg0, %c0_i32 : i32, i32
  }
}

</mosaic_0001>

<llo_original>
// kernel: conv_bn_leaky.1
$region0: #{conv_bn_leaky.1}
  #allocation0 [shape = 'u32[]', space=smem, size = 0x4, offset = 0x4, fixed_abs, tag = 'smem constant byte address 0x4 - core index']
  #allocation1 [shape = 'u32[72,128]{1,0:T(1,128)}', space=vmem, size = 0x9000, scoped, tag = 'internal scratch']
  %s0 = inlined_call_operand.vmem [shape: bf16[512,128], index: 0, kind: input, shape index: {}]
  %s1 = inlined_call_operand.vmem [shape: bf16[128,128], index: 1, kind: input, shape index: {}]
  %s2 = inlined_call_operand.vmem [shape: f32[1,128], index: 2, kind: input, shape index: {}]
  %s3 = inlined_call_operand.vmem [shape: f32[512,128], index: 3, kind: output, shape index: {}]
  %s4 = sld [smem:[#allocation0]]
  $region45: #{conv_bn_leaky.1} parent=0
    _
  %s6 = ssub.s32 1, %s4
  %s7 = scalar_select 0, %s6, %s4
  loop: start=0, step=1, limit=4
  $region2: #{conv_bn_leaky.1} parent=0 // loop_pre_header
    _
  $region3: #{conv_bn_leaky.1} parent=0 // loop_header
    %s9 = sphi 0, %s13
    %p10 = scmp.ge.s32.totalorder %s9, 4
    %s19 = sphi 0, %s21
    %s22 = sphi 0, %s19
    %s23 = sphi 0, %s22
    %s39 = sphi 0, %s23
    %s43 = sphi 0, %s43
    %s45 = sphi 0, %s43
    %s46 = sphi 0, %s45
    %s60 = sphi 0, %s46
    %s64 = sphi 0, %s64
    %s66 = sphi 0, %s64
    %s67 = sphi 0, %s66
    %s81 = sphi 0, %s67
    %s87 = sphi 0, %s89
    %s90 = sphi 0, %s87
    %s91 = sphi 0, %s90
    %s107 = sphi 0, %s91
  $region4: #{conv_bn_leaky.1} parent=0 // loop_header_branch
    %12 = sbr.rel (%p10) target = $region8
  $region5: #{conv_bn_leaky.1} parent=0 // loop_body
    %s14 = ssub.s32 %s9, 1
    %s15 = ssub.s32 %s9, 2
    %s16 = sadd.s32 %s9, 1
    %s17 = ssub.s32 %s9, %s16
    %p18 = scmp.eq.s32.totalorder %s17, 0
    %s20 = sadd.s32 %s19, 1
    %s21 = scalar_select %p18, %s19, %s20
    %p24 = pneg %p18
    %p25 = scmp.eq.s32.totalorder %s9, 1
    %p26 = por %p24, %p25
    %p27 = scmp.ne.s32.totalorder %s19, %s22
    %p28 = scmp.eq.s32.totalorder %s9, 0
    %p29 = por %p27, %p28
    %p30 = scmp.ne.s32.totalorder %s19, %s22
    %p31 = scmp.eq.s32.totalorder %s14, 1
    %p32 = por %p30, %p31
    %p33 = scmp.ne.s32.totalorder %s22, %s23
    %p34 = scmp.eq.s32.totalorder %s14, 0
    %p35 = por %p33, %p34
    %p36 = scmp.ne.s32.totalorder %s22, %s23
    %p37 = scmp.eq.s32.totalorder %s15, 1
    %p38 = por %p36, %p37
    %p40 = scmp.ne.s32.totalorder %s23, %s39
    %p41 = scmp.eq.s32.totalorder %s15, 0
    %p42 = por %p40, %p41
    %s44 = sadd.s32 %s43, 1
    %p47 = scmp.eq.s32.totalorder %s9, 1
    %p48 = scmp.ne.s32.totalorder %s43, %s45
    %p49 = scmp.eq.s32.totalorder %s9, 0
    %p50 = por %p48, %p49
    %p51 = scmp.ne.s32.totalorder %s43, %s45
    %p52 = scmp.eq.s32.totalorder %s14, 1
    %p53 = por %p51, %p52
    %p54 = scmp.ne.s32.totalorder %s45, %s46
    %p55 = scmp.eq.s32.totalorder %s14, 0
    %p56 = por %p54, %p55
    %p57 = scmp.ne.s32.totalorder %s45, %s46
    %p58 = scmp.eq.s32.totalorder %s15, 1
    %p59 = por %p57, %p58
    %p61 = scmp.ne.s32.totalorder %s46, %s60
    %p62 = scmp.eq.s32.totalorder %s15, 0
    %p63 = por %p61, %p62
    %s65 = sadd.s32 %s64, 1
    %p68 = scmp.eq.s32.totalorder %s9, 1
    %p69 = scmp.ne.s32.totalorder %s64, %s66
    %p70 = scmp.eq.s32.totalorder %s9, 0
    %p71 = por %p69, %p70
    %p72 = scmp.ne.s32.totalorder %s64, %s66
    %p73 = scmp.eq.s32.totalorder %s14, 1
    %p74 = por %p72, %p73
    %p75 = scmp.ne.s32.totalorder %s66, %s67
    %p76 = scmp.eq.s32.totalorder %s14, 0
    %p77 = por %p75, %p76
    %p78 = scmp.ne.s32.totalorder %s66, %s67
    %p79 = scmp.eq.s32.totalorder %s15, 1
    %p80 = por %p78, %p79
    %p82 = scmp.ne.s32.totalorder %s67, %s81
    %p83 = scmp.eq.s32.totalorder %s15, 0
    %p84 = por %p82, %p83
    %s85 = ssub.s32 %s9, %s16
    %p86 = scmp.eq.s32.totalorder %s85, 0
    %s88 = sadd.s32 %s87, 1
    %s89 = scalar_select %p86, %s87, %s88
    %p92 = pneg %p86
    %p93 = scmp.eq.s32.totalorder %s9, 1
    %p94 = por %p92, %p93
    %p95 = scmp.ne.s32.totalorder %s87, %s90
    %p96 = scmp.eq.s32.totalorder %s9, 0
    %p97 = por %p95, %p96
    %p98 = scmp.ne.s32.totalorder %s87, %s90
    %p99 = scmp.eq.s32.totalorder %s14, 1
    %p100 = por %p98, %p99
    %p101 = scmp.ne.s32.totalorder %s90, %s91
    %p102 = scmp.eq.s32.totalorder %s14, 0
    %p103 = por %p101, %p102
    %p104 = scmp.ne.s32.totalorder %s90, %s91
    %p105 = scmp.eq.s32.totalorder %s15, 1
    %p106 = por %p104, %p105
    %p108 = scmp.ne.s32.totalorder %s91, %s107
    %p109 = scmp.eq.s32.totalorder %s15, 0
    %p110 = por %p108, %p109
    %p111 = scmp.le.s32.totalorder 1, %s9
    %p112 = scmp.lt.s32.totalorder %s9, 3
    %p113 = pnand %p111, %p112
    %p114 = pneg %p113
    // Predicated region
    $region9: #{conv_bn_leaky.1} parent=5 // pred_check
      _
    $region10: #{conv_bn_leaky.1} parent=5 // pred_check_branch
      %116 = sbr.rel (%p113) target = $region12
    $region11: #{conv_bn_leaky.1} parent=5 // pred_region
      %s117 = ssub.s32 %s9, 1
      // Predicated region
      $region13: #{conv_bn_leaky.1} parent=11 // pred_check
        %p118 = pneg %p56
      $region14: #{conv_bn_leaky.1} parent=11 // pred_check_branch
        %120 = sbr.rel (%p118) target = $region16
      $region15: #{conv_bn_leaky.1} parent=11 // pred_region
        _
      $region16: #{conv_bn_leaky.1} parent=11 // pred_fallthru
        _
      // Predicated region
      $region17: #{conv_bn_leaky.1} parent=11 // pred_check
        %p121 = pneg %p77
      $region18: #{conv_bn_leaky.1} parent=11 // pred_check_branch
        %123 = sbr.rel (%p121) target = $region20
      $region19: #{conv_bn_leaky.1} parent=11 // pred_region
        _
      $region20: #{conv_bn_leaky.1} parent=11 // pred_fallthru
        _
    $region12: #{conv_bn_leaky.1} parent=5 // pred_fallthru
      _
    %p124 = scmp.lt.s32.totalorder %s9, 2
    // Predicated region
    $region21: #{conv_bn_leaky.1} parent=5 // pred_check
      %p125 = pneg %p124
    $region22: #{conv_bn_leaky.1} parent=5 // pred_check_branch
      %127 = sbr.rel (%p125) target = $region24
    $region23: #{conv_bn_leaky.1} parent=5 // pred_region
      // Predicated region
      $region25: #{conv_bn_leaky.1} parent=23 // pred_check
        %p128 = pneg %p29
      $region26: #{conv_bn_leaky.1} parent=23 // pred_check_branch
        %130 = sbr.rel (%p128) target = $region28
      $region27: #{conv_bn_leaky.1} parent=23 // pred_region
        %s131 = smul.u32 32, %s9
        %p132 = scmp.lt.s32.totalorder %s131, 63
        %s133 = scalar_select %p132, %s131, 63
        %s134 = smul.addr %s133, 4
        %s135 = scalar_lea.vmem %s0, %s134
        %s136 = smul.u32 32, %s9
      $region28: #{conv_bn_leaky.1} parent=23 // pred_fallthru
        _
    $region24: #{conv_bn_leaky.1} parent=5 // pred_fallthru
      _
    %p137 = scmp.le.s32.totalorder 1, %s9
    %p138 = scmp.lt.s32.totalorder %s9, 3
    %p139 = pnand %p137, %p138
    %p140 = pneg %p139
    // Predicated region
    $region29: #{conv_bn_leaky.1} parent=5 // pred_check
      _
    $region30: #{conv_bn_leaky.1} parent=5 // pred_check_branch
      %142 = sbr.rel (%p139) target = $region32
    $region31: #{conv_bn_leaky.1} parent=5 // pred_region
      %s143 = ssub.s32 %s9, 1
      %s144 = smul.u32 32, %s14
      %p145 = scmp.lt.s32.totalorder %s144, 63
      %s146 = scalar_select %p145, %s144, 63
      %s147 = smul.addr %s146, 4
      %s148 = scalar_lea.vmem %s0, %s147
      %p149 = pneg %p35
      %p150 = pneg %p32
      %p151 = pneg %p56
      %p152 = pneg %p53
      %p153 = pneg %p77
      %p154 = pneg %p74
      %p155 = pneg %p103
      %p156 = pneg %p100
      %s157 = smul.u32 32, %s14
      %p158 = scmp.lt.s32.totalorder %s157, 63
      %s159 = scalar_select %p158, %s157, 63
      %s160 = smul.addr %s159, 8
      %s161 = scalar_lea.vmem %s3, %s160
      %s162 = smul.u32 32, %s14
      %p163 = scmp.lt.s32.totalorder %s162, 63
      %s164 = scalar_select %p163, %s162, 63
      %s165 = smul.addr %s164, 4
      %s166 = scalar_lea.vmem %s0, %s165
      %s167 = smul.u32 32, %s14
      %s168 = smul.u32 32, %s14
      %p169 = scmp.lt.s32.totalorder %s168, 63
      %s170 = scalar_select %p169, %s168, 63
      %s171 = smul.addr %s170, 8
      %s172 = scalar_lea.vmem %s3, %s171
      %s173 = smul.u32 32, %s14
      %v174 = vld [vmem:[%s166] sm:$0xf]
      %v175 = vld [vmem:[%s166 + $0x4] sm:$0xf]
      %v176 = vld [vmem:[%s166 + $0x8] sm:$0xf]
      %v177 = vld [vmem:[%s166 + $0xc] sm:$0xf]
      %v178 = vld [vmem:[%s166 + $0x10] sm:$0xf]
      %v179 = vld [vmem:[%s166 + $0x14] sm:$0xf]
      %v180 = vld [vmem:[%s166 + $0x18] sm:$0xf]
      %v181 = vld [vmem:[%s166 + $0x1c] sm:$0xf]
      %v182 = vld [vmem:[%s166 + $0x20] sm:$0xf]
      %v183 = vld [vmem:[%s166 + $0x24] sm:$0xf]
      %v184 = vld [vmem:[%s166 + $0x28] sm:$0xf]
      %v185 = vld [vmem:[%s166 + $0x2c] sm:$0xf]
      %v186 = vld [vmem:[%s166 + $0x30] sm:$0xf]
      %v187 = vld [vmem:[%s166 + $0x34] sm:$0xf]
      %v188 = vld [vmem:[%s166 + $0x38] sm:$0xf]
      %v189 = vld [vmem:[%s166 + $0x3c] sm:$0xf]
      %v190 = vld [vmem:[%s166 + $0x40] sm:$0xf]
      %v191 = vld [vmem:[%s166 + $0x44] sm:$0xf]
      %v192 = vld [vmem:[%s166 + $0x48] sm:$0xf]
      %v193 = vld [vmem:[%s166 + $0x4c] sm:$0xf]
      %v194 = vld [vmem:[%s166 + $0x50] sm:$0xf]
      %v195 = vld [vmem:[%s166 + $0x54] sm:$0xf]
      %v196 = vld [vmem:[%s166 + $0x58] sm:$0xf]
      %v197 = vld [vmem:[%s166 + $0x5c] sm:$0xf]
      %v198 = vld [vmem:[%s166 + $0x60] sm:$0xf]
      %v199 = vld [vmem:[%s166 + $0x64] sm:$0xf]
      %v200 = vld [vmem:[%s166 + $0x68] sm:$0xf]
      %v201 = vld [vmem:[%s166 + $0x6c] sm:$0xf]
      %v202 = vld [vmem:[%s166 + $0x70] sm:$0xf]
      %v203 = vld [vmem:[%s166 + $0x74] sm:$0xf]
      %v204 = vld [vmem:[%s166 + $0x78] sm:$0xf]
      %v205 = vld [vmem:[%s166 + $0x7c] sm:$0xf]
      %v206 = vld [vmem:[%s1] sm:$0xf]
      %v207 = vld [vmem:[%s1 + $0x4] sm:$0xf]
      %v208 = vld [vmem:[%s1 + $0x8] sm:$0xf]
      %v209 = vld [vmem:[%s1 + $0xc] sm:$0xf]
      %v210 = vld [vmem:[%s1 + $0x10] sm:$0xf]
      %v211 = vld [vmem:[%s1 + $0x14] sm:$0xf]
      %v212 = vld [vmem:[%s1 + $0x18] sm:$0xf]
      %v213 = vld [vmem:[%s1 + $0x1c] sm:$0xf]
      %v214 = vld [vmem:[%s1 + $0x20] sm:$0xf]
      %v215 = vld [vmem:[%s1 + $0x24] sm:$0xf]
      %v216 = vld [vmem:[%s1 + $0x28] sm:$0xf]
      %v217 = vld [vmem:[%s1 + $0x2c] sm:$0xf]
      %v218 = vld [vmem:[%s1 + $0x30] sm:$0xf]
      %v219 = vld [vmem:[%s1 + $0x34] sm:$0xf]
      %v220 = vld [vmem:[%s1 + $0x38] sm:$0xf]
      %v221 = vld [vmem:[%s1 + $0x3c] sm:$0xf]
      %v222 = vld [vmem:[%s2] sm:$0x1]
      %v224 = vperm.slane %v222, 0
      %v258 = vunpack.c.l.b16 %v174
      %v259 = vunpack.c.l.b16 %v175
      %v260 = vunpack.c.l.b16 %v176
      %v261 = vunpack.c.l.b16 %v177
      %v262 = vunpack.c.l.b16 %v178
      %v263 = vunpack.c.l.b16 %v179
      %v264 = vunpack.c.l.b16 %v180
      %v265 = vunpack.c.l.b16 %v181
      %v266 = vunpack.c.l.b16 %v182
      %v267 = vunpack.c.l.b16 %v183
      %v268 = vunpack.c.l.b16 %v184
      %v269 = vunpack.c.l.b16 %v185
      %v270 = vunpack.c.l.b16 %v186
      %v271 = vunpack.c.l.b16 %v187
      %v272 = vunpack.c.l.b16 %v188
      %v273 = vunpack.c.l.b16 %v189
      %v274 = vunpack.c.l.b16 %v190
      %v275 = vunpack.c.l.b16 %v191
      %v276 = vunpack.c.l.b16 %v192
      %v277 = vunpack.c.l.b16 %v193
      %v278 = vunpack.c.l.b16 %v194
      %v279 = vunpack.c.l.b16 %v195
      %v280 = vunpack.c.l.b16 %v196
      %v281 = vunpack.c.l.b16 %v197
      %v282 = vunpack.c.l.b16 %v198
      %v283 = vunpack.c.l.b16 %v199
      %v284 = vunpack.c.l.b16 %v200
      %v285 = vunpack.c.l.b16 %v201
      %v286 = vunpack.c.l.b16 %v202
      %v287 = vunpack.c.l.b16 %v203
      %v288 = vunpack.c.l.b16 %v204
      %v289 = vunpack.c.l.b16 %v205
      %v290 = vpack.c.b16 %v259, %v258
      %v291 = vpack.c.b16 %v261, %v260
      %v292 = vpack.c.b16 %v263, %v262
      %v293 = vpack.c.b16 %v265, %v264
      %v294 = vpack.c.b16 %v267, %v266
      %v295 = vpack.c.b16 %v269, %v268
      %v296 = vpack.c.b16 %v271, %v270
      %v297 = vpack.c.b16 %v273, %v272
      %v298 = vpack.c.b16 %v275, %v274
      %v299 = vpack.c.b16 %v277, %v276
      %v300 = vpack.c.b16 %v279, %v278
      %v301 = vpack.c.b16 %v281, %v280
      %v302 = vpack.c.b16 %v283, %v282
      %v303 = vpack.c.b16 %v285, %v284
      %v304 = vpack.c.b16 %v287, %v286
      %v305 = vpack.c.b16 %v289, %v288
      %v338 = vunpack.c.l.b16 %v206
      %v339 = vunpack.c.l.b16 %v207
      %v340 = vunpack.c.l.b16 %v208
      %v341 = vunpack.c.l.b16 %v209
      %v342 = vunpack.c.l.b16 %v210
      %v343 = vunpack.c.l.b16 %v211
      %v344 = vunpack.c.l.b16 %v212
      %v345 = vunpack.c.l.b16 %v213
      %v346 = vunpack.c.l.b16 %v214
      %v347 = vunpack.c.l.b16 %v215
      %v348 = vunpack.c.l.b16 %v216
      %v349 = vunpack.c.l.b16 %v217
      %v350 = vunpack.c.l.b16 %v218
      %v351 = vunpack.c.l.b16 %v219
      %v352 = vunpack.c.l.b16 %v220
      %v353 = vunpack.c.l.b16 %v221
      %v354 = vpack.c.b16 %v339, %v338
      %v355 = vpack.c.b16 %v341, %v340
      %v356 = vpack.c.b16 %v343, %v342
      %v357 = vpack.c.b16 %v345, %v344
      %v358 = vpack.c.b16 %v347, %v346
      %v359 = vpack.c.b16 %v349, %v348
      %v360 = vpack.c.b16 %v351, %v350
      %v361 = vpack.c.b16 %v353, %v352
      %370 = vmatpush.bf16.msra.mxu0 %v361
      %371 = vmatpush.bf16.msra.mxu0 %v360
      %372 = vmatpush.bf16.msra.mxu0 %v359
      %373 = vmatpush.bf16.msra.mxu0 %v358
      %374 = vmatpush.bf16.msra.mxu0 %v357
      %375 = vmatpush.bf16.msra.mxu0 %v356
      %376 = vmatpush.bf16.msra.mxu0 %v355
      %377 = vmatpush.bf16.msra.mxu0 %v354
      %378 = vmatmul.bf16.gmra.mxu0 %v290
      %v379 = vpop.f32.mrf.mxu0
      %v380 = vadd.f32 %v224, %v379
      %v381 = vpop.f32.mrf.mxu0
      %v382 = vadd.f32 %v224, %v381
      %383 = vmatmul.bf16.gmra.mxu0 %v291
      %v384 = vpop.f32.mrf.mxu0
      %v385 = vadd.f32 %v224, %v384
      %v386 = vpop.f32.mrf.mxu0
      %v387 = vadd.f32 %v224, %v386
      %388 = vmatmul.bf16.gmra.mxu0 %v292
      %v389 = vpop.f32.mrf.mxu0
      %v390 = vadd.f32 %v224, %v389
      %v391 = vpop.f32.mrf.mxu0
      %v392 = vadd.f32 %v224, %v391
      %393 = vmatmul.bf16.gmra.mxu0 %v293
      %v394 = vpop.f32.mrf.mxu0
      %v395 = vadd.f32 %v224, %v394
      %v396 = vpop.f32.mrf.mxu0
      %v397 = vadd.f32 %v224, %v396
      %398 = vmatmul.bf16.gmra.mxu0 %v294
      %v399 = vpop.f32.mrf.mxu0
      %v400 = vadd.f32 %v224, %v399
      %v401 = vpop.f32.mrf.mxu0
      %v402 = vadd.f32 %v224, %v401
      %403 = vmatmul.bf16.gmra.mxu0 %v295
      %v404 = vpop.f32.mrf.mxu0
      %v405 = vadd.f32 %v224, %v404
      %v406 = vpop.f32.mrf.mxu0
      %v407 = vadd.f32 %v224, %v406
      %408 = vmatmul.bf16.gmra.mxu0 %v296
      %v409 = vpop.f32.mrf.mxu0
      %v410 = vadd.f32 %v224, %v409
      %v411 = vpop.f32.mrf.mxu0
      %v412 = vadd.f32 %v224, %v411
      %413 = vmatmul.bf16.gmra.mxu0 %v297
      %v414 = vpop.f32.mrf.mxu0
      %v415 = vadd.f32 %v224, %v414
      %v416 = vpop.f32.mrf.mxu0
      %v417 = vadd.f32 %v224, %v416
      %418 = vmatmul.bf16.gmra.mxu0 %v298
      %v419 = vpop.f32.mrf.mxu0
      %v420 = vadd.f32 %v224, %v419
      %v421 = vpop.f32.mrf.mxu0
      %v422 = vadd.f32 %v224, %v421
      %423 = vmatmul.bf16.gmra.mxu0 %v299
      %v424 = vpop.f32.mrf.mxu0
      %v425 = vadd.f32 %v224, %v424
      %v426 = vpop.f32.mrf.mxu0
      %v427 = vadd.f32 %v224, %v426
      %428 = vmatmul.bf16.gmra.mxu0 %v300
      %v429 = vpop.f32.mrf.mxu0
      %v430 = vadd.f32 %v224, %v429
      %v431 = vpop.f32.mrf.mxu0
      %v432 = vadd.f32 %v224, %v431
      %433 = vmatmul.bf16.gmra.mxu0 %v301
      %v434 = vpop.f32.mrf.mxu0
      %v435 = vadd.f32 %v224, %v434
      %v436 = vpop.f32.mrf.mxu0
      %v437 = vadd.f32 %v224, %v436
      %438 = vmatmul.bf16.gmra.mxu0 %v302
      %v439 = vpop.f32.mrf.mxu0
      %v440 = vadd.f32 %v224, %v439
      %v441 = vpop.f32.mrf.mxu0
      %v442 = vadd.f32 %v224, %v441
      %443 = vmatmul.bf16.gmra.mxu0 %v303
      %v444 = vpop.f32.mrf.mxu0
      %v445 = vadd.f32 %v224, %v444
      %v446 = vpop.f32.mrf.mxu0
      %v447 = vadd.f32 %v224, %v446
      %448 = vmatmul.bf16.gmra.mxu0 %v304
      %v449 = vpop.f32.mrf.mxu0
      %v450 = vadd.f32 %v224, %v449
      %v451 = vpop.f32.mrf.mxu0
      %v452 = vadd.f32 %v224, %v451
      %453 = vmatmul.bf16.gmra.mxu0 %v305
      %v454 = vpop.f32.mrf.mxu0
      %v455 = vadd.f32 %v224, %v454
      %v456 = vpop.f32.mrf.mxu0
      %v457 = vadd.f32 %v224, %v456
      %458 = vdwg.mxu0
      %vm459 = vcmp.gt.f32.partialorder %v380, 0.0
      %vm460 = vcmp.gt.f32.partialorder %v382, 0.0
      %vm461 = vcmp.gt.f32.partialorder %v385, 0.0
      %vm462 = vcmp.gt.f32.partialorder %v387, 0.0
      %vm463 = vcmp.gt.f32.partialorder %v390, 0.0
      %vm464 = vcmp.gt.f32.partialorder %v392, 0.0
      %vm465 = vcmp.gt.f32.partialorder %v395, 0.0
      %vm466 = vcmp.gt.f32.partialorder %v397, 0.0
      %vm467 = vcmp.gt.f32.partialorder %v400, 0.0
      %vm468 = vcmp.gt.f32.partialorder %v402, 0.0
      %vm469 = vcmp.gt.f32.partialorder %v405, 0.0
      %vm470 = vcmp.gt.f32.partialorder %v407, 0.0
      %vm471 = vcmp.gt.f32.partialorder %v410, 0.0
      %vm472 = vcmp.gt.f32.partialorder %v412, 0.0
      %vm473 = vcmp.gt.f32.partialorder %v415, 0.0
      %vm474 = vcmp.gt.f32.partialorder %v417, 0.0
      %vm475 = vcmp.gt.f32.partialorder %v420, 0.0
      %vm476 = vcmp.gt.f32.partialorder %v422, 0.0
      %vm477 = vcmp.gt.f32.partialorder %v425, 0.0
      %vm478 = vcmp.gt.f32.partialorder %v427, 0.0
      %vm479 = vcmp.gt.f32.partialorder %v430, 0.0
      %vm480 = vcmp.gt.f32.partialorder %v432, 0.0
      %vm481 = vcmp.gt.f32.partialorder %v435, 0.0
      %vm482 = vcmp.gt.f32.partialorder %v437, 0.0
      %vm483 = vcmp.gt.f32.partialorder %v440, 0.0
      %vm484 = vcmp.gt.f32.partialorder %v442, 0.0
      %vm485 = vcmp.gt.f32.partialorder %v445, 0.0
      %vm486 = vcmp.gt.f32.partialorder %v447, 0.0
      %vm487 = vcmp.gt.f32.partialorder %v450, 0.0
      %vm488 = vcmp.gt.f32.partialorder %v452, 0.0
      %vm489 = vcmp.gt.f32.partialorder %v455, 0.0
      %vm490 = vcmp.gt.f32.partialorder %v457, 0.0
      %v491 = vmul.f32 %v380, 0.1
      %v492 = vmul.f32 %v382, 0.1
      %v493 = vmul.f32 %v385, 0.1
      %v494 = vmul.f32 %v387, 0.1
      %v495 = vmul.f32 %v390, 0.1
      %v496 = vmul.f32 %v392, 0.1
      %v497 = vmul.f32 %v395, 0.1
      %v498 = vmul.f32 %v397, 0.1
      %v499 = vmul.f32 %v400, 0.1
      %v500 = vmul.f32 %v402, 0.1
      %v501 = vmul.f32 %v405, 0.1
      %v502 = vmul.f32 %v407, 0.1
      %v503 = vmul.f32 %v410, 0.1
      %v504 = vmul.f32 %v412, 0.1
      %v505 = vmul.f32 %v415, 0.1
      %v506 = vmul.f32 %v417, 0.1
      %v507 = vmul.f32 %v420, 0.1
      %v508 = vmul.f32 %v422, 0.1
      %v509 = vmul.f32 %v425, 0.1
      %v510 = vmul.f32 %v427, 0.1
      %v511 = vmul.f32 %v430, 0.1
      %v512 = vmul.f32 %v432, 0.1
      %v513 = vmul.f32 %v435, 0.1
      %v514 = vmul.f32 %v437, 0.1
      %v515 = vmul.f32 %v440, 0.1
      %v516 = vmul.f32 %v442, 0.1
      %v517 = vmul.f32 %v445, 0.1
      %v518 = vmul.f32 %v447, 0.1
      %v519 = vmul.f32 %v450, 0.1
      %v520 = vmul.f32 %v452, 0.1
      %v521 = vmul.f32 %v455, 0.1
      %v522 = vmul.f32 %v457, 0.1
      %v523 = vsel %vm459, %v380, %v491
      %v524 = vsel %vm460, %v382, %v492
      %v525 = vsel %vm461, %v385, %v493
      %v526 = vsel %vm462, %v387, %v494
      %v527 = vsel %vm463, %v390, %v495
      %v528 = vsel %vm464, %v392, %v496
      %v529 = vsel %vm465, %v395, %v497
      %v530 = vsel %vm466, %v397, %v498
      %v531 = vsel %vm467, %v400, %v499
      %v532 = vsel %vm468, %v402, %v500
      %v533 = vsel %vm469, %v405, %v501
      %v534 = vsel %vm470, %v407, %v502
      %v535 = vsel %vm471, %v410, %v503
      %v536 = vsel %vm472, %v412, %v504
      %v537 = vsel %vm473, %v415, %v505
      %v538 = vsel %vm474, %v417, %v506
      %v539 = vsel %vm475, %v420, %v507
      %v540 = vsel %vm476, %v422, %v508
      %v541 = vsel %vm477, %v425, %v509
      %v542 = vsel %vm478, %v427, %v510
      %v543 = vsel %vm479, %v430, %v511
      %v544 = vsel %vm480, %v432, %v512
      %v545 = vsel %vm481, %v435, %v513
      %v546 = vsel %vm482, %v437, %v514
      %v547 = vsel %vm483, %v440, %v515
      %v548 = vsel %vm484, %v442, %v516
      %v549 = vsel %vm485, %v445, %v517
      %v550 = vsel %vm486, %v447, %v518
      %v551 = vsel %vm487, %v450, %v519
      %v552 = vsel %vm488, %v452, %v520
      %v553 = vsel %vm489, %v455, %v521
      %v554 = vsel %vm490, %v457, %v522
      %555 = vst [vmem:[%s172] sm:$0xff] %v523
      %556 = vst [vmem:[%s172 + $0x8] sm:$0xff] %v524
      %557 = vst [vmem:[%s172 + $0x10] sm:$0xff] %v525
      %558 = vst [vmem:[%s172 + $0x18] sm:$0xff] %v526
      %559 = vst [vmem:[%s172 + $0x20] sm:$0xff] %v527
      %560 = vst [vmem:[%s172 + $0x28] sm:$0xff] %v528
      %561 = vst [vmem:[%s172 + $0x30] sm:$0xff] %v529
      %562 = vst [vmem:[%s172 + $0x38] sm:$0xff] %v530
      %563 = vst [vmem:[%s172 + $0x40] sm:$0xff] %v531
      %564 = vst [vmem:[%s172 + $0x48] sm:$0xff] %v532
      %565 = vst [vmem:[%s172 + $0x50] sm:$0xff] %v533
      %566 = vst [vmem:[%s172 + $0x58] sm:$0xff] %v534
      %567 = vst [vmem:[%s172 + $0x60] sm:$0xff] %v535
      %568 = vst [vmem:[%s172 + $0x68] sm:$0xff] %v536
      %569 = vst [vmem:[%s172 + $0x70] sm:$0xff] %v537
      %570 = vst [vmem:[%s172 + $0x78] sm:$0xff] %v538
      %571 = vst [vmem:[%s172 + $0x80] sm:$0xff] %v539
      %572 = vst [vmem:[%s172 + $0x88] sm:$0xff] %v540
      %573 = vst [vmem:[%s172 + $0x90] sm:$0xff] %v541
      %574 = vst [vmem:[%s172 + $0x98] sm:$0xff] %v542
      %575 = vst [vmem:[%s172 + $0xa0] sm:$0xff] %v543
      %576 = vst [vmem:[%s172 + $0xa8] sm:$0xff] %v544
      %577 = vst [vmem:[%s172 + $0xb0] sm:$0xff] %v545
      %578 = vst [vmem:[%s172 + $0xb8] sm:$0xff] %v546
      %579 = vst [vmem:[%s172 + $0xc0] sm:$0xff] %v547
      %580 = vst [vmem:[%s172 + $0xc8] sm:$0xff] %v548
      %581 = vst [vmem:[%s172 + $0xd0] sm:$0xff] %v549
      %582 = vst [vmem:[%s172 + $0xd8] sm:$0xff] %v550
      %583 = vst [vmem:[%s172 + $0xe0] sm:$0xff] %v551
      %584 = vst [vmem:[%s172 + $0xe8] sm:$0xff] %v552
      %585 = vst [vmem:[%s172 + $0xf0] sm:$0xff] %v553
      %586 = vst [vmem:[%s172 + $0xf8] sm:$0xff] %v554
      %s587 = smul.u32 32, %s14
      %p588 = scmp.lt.s32.totalorder %s587, 63
      %s589 = scalar_select %p588, %s587, 63
      %s590 = smul.addr %s589, 8
      %s591 = scalar_lea.vmem %s3, %s590
      // Predicated region
      $region33: #{conv_bn_leaky.1} parent=31 // pred_check
        %p592 = pneg %p100
      $region34: #{conv_bn_leaky.1} parent=31 // pred_check_branch
        %594 = sbr.rel (%p592) target = $region36
      $region35: #{conv_bn_leaky.1} parent=31 // pred_region
        %s595 = smul.u32 32, %s14
      $region36: #{conv_bn_leaky.1} parent=31 // pred_fallthru
        _
    $region32: #{conv_bn_leaky.1} parent=5 // pred_fallthru
      _
    %p596 = scmp.le.s32.totalorder 2, %s9
    // Predicated region
    $region37: #{conv_bn_leaky.1} parent=5 // pred_check
      %p597 = pneg %p596
    $region38: #{conv_bn_leaky.1} parent=5 // pred_check_branch
      %599 = sbr.rel (%p597) target = $region40
    $region39: #{conv_bn_leaky.1} parent=5 // pred_region
      %s600 = ssub.s32 %s9, 2
      // Predicated region
      $region41: #{conv_bn_leaky.1} parent=39 // pred_check
        %p601 = pneg %p106
      $region42: #{conv_bn_leaky.1} parent=39 // pred_check_branch
        %603 = sbr.rel (%p601) target = $region44
      $region43: #{conv_bn_leaky.1} parent=39 // pred_region
        %s604 = smul.u32 32, %s15
        %p605 = scmp.lt.s32.totalorder %s604, 63
        %s606 = scalar_select %p605, %s604, 63
        %s607 = smul.addr %s606, 8
        %s608 = scalar_lea.vmem %s3, %s607
      $region44: #{conv_bn_leaky.1} parent=39 // pred_fallthru
        _
    $region40: #{conv_bn_leaky.1} parent=5 // pred_fallthru
      _
  $region6: #{conv_bn_leaky.1} parent=0 // loop_footer
    %s13 = sadd.s32 1, %s9
  $region7: #{conv_bn_leaky.1} parent=0 // loop_footer_branch
    %8 = sbr.rel target = $region3
  $region8: #{conv_bn_leaky.1} parent=0 // loop_exit
    _

</llo_original>
